<compile_context>
chip_gen: v7x
topology: tpu7x:2x2x1
jax: 0.10.0
libtpu: 0.0.40
codegen_flags: <defaults>
</compile_context>

<pallas_src>
import jax
import jax.numpy as jnp
from jax.experimental import pallas as pl
from jax.experimental.pallas import tpu as pltpu

EPS = 1e-10


def _vmem_limit_bytes():
    """Per-generation scoped-VMEM budget: 64 MiB on v5e/v6e, ~48 MiB on v7x."""
    cap = 64 << 20  # conservative fallback (v7x physical per-TC VMEM)
    try:
        cap = int(getattr(pltpu.get_tpu_info(), "vmem_capacity_bytes", cap))
    except Exception:
        pass
    return int(min(64 << 20, (cap * 3) // 4))


def _scale_and_store(x, xf, inv, w, o_ref):
    """Final scaling pass; keeps sub-32-bit activations in their native dtype."""
    if o_ref.dtype == jnp.float32:
        o_ref[...] = ((xf * inv) * w.astype(jnp.float32)).astype(o_ref.dtype)
    else:
        o_ref[...] = ((x * inv.astype(x.dtype)) * w.astype(x.dtype)).astype(o_ref.dtype)


def _l2norm_kernel_batch(x_ref, w_ref, o_ref):
    # x_ref / o_ref: (TILE_N, C, S); w_ref: (1, C, 1).
    x = x_ref[...]
    xf = x.astype(jnp.float32)
    sumsq = jnp.sum(xf * xf, axis=1, keepdims=True)            # (TILE_N, 1, S)
    inv = pl.reciprocal(jnp.sqrt(sumsq) + EPS, approx=False)   # exact: matches ref
    _scale_and_store(x, xf, inv, w_ref[...], o_ref)


def _l2norm_kernel_spatial(x_ref, w_ref, o_ref):
    # x_ref / o_ref: (C, TILE_S) block (batch dim squeezed); w_ref: (C, 1).
    x = x_ref[...]
    xf = x.astype(jnp.float32)
    sumsq = jnp.sum(xf * xf, axis=0, keepdims=True)            # (1, TILE_S)
    inv = pl.reciprocal(jnp.sqrt(sumsq) + EPS, approx=False)
    _scale_and_store(x, xf, inv, w_ref[...], o_ref)


def l2norm_nchw(x, weight):
    """x: (N, C, H, W) NCHW like the PyTorch module; weight: (C,)."""
    N, C, H, W = x.shape
    S = H * W
    x3 = x.reshape(N, C, S)                 # free reshape (contiguous trailing dims)
    itemsize = x.dtype.itemsize

    vmem_limit = _vmem_limit_bytes()
    # ~4x block (double-buffered in+out) + weight must fit the scoped budget.
    block_target = min(4 << 20, vmem_limit // 8)
    per_image = C * S * itemsize

    if per_image <= block_target:
        # ---- Batch-blocked path: one (TILE_N, C, S) block per grid step. ----
        tile_n = min(N, max(1, block_target // max(per_image, 1)))
        if N >= 2:
            # Ensure >= 2 grid steps so both v7x TensorCores get work
            # (no-op on single-TC generations, negligible overhead otherwise).
            tile_n = min(tile_n, pl.cdiv(N, 2))
        grid = (pl.cdiv(N, tile_n),)
        w_arr = weight.reshape(1, C, 1)
        kernel = _l2norm_kernel_batch
        in_specs = [
            pl.BlockSpec((tile_n, C, S), lambda n: (n, 0, 0)),
            pl.BlockSpec((1, C, 1), lambda n: (0, 0, 0)),
        ]
        out_specs = pl.BlockSpec((tile_n, C, S), lambda n: (n, 0, 0))
        dim_sem = ("parallel",)
    else:
        # ---- Spatial-tiled path: (1, C, TILE_S) blocks, TILE_S sized by VMEM. ----
        tile_s = block_target // (C * itemsize)
        tile_s = max(128, (tile_s // 128) * 128)   # lane dim: multiple of 128
        if tile_s >= S:
            tile_s = S                              # full-extent lane dim is legal
        s_tiles = pl.cdiv(S, tile_s)                # ragged boundary blocks padded
        w_arr = weight.reshape(C, 1)
        kernel = _l2norm_kernel_spatial
        if s_tiles >= N:
            # Put the longer axis first so megacore sharding has enough steps.
            grid = (s_tiles, N)
            x_idx = lambda s, n: (n, 0, s)
            w_idx = lambda s, n: (0, 0)
        else:
            grid = (N, s_tiles)
            x_idx = lambda n, s: (n, 0, s)
            w_idx = lambda n, s: (0, 0)
        in_specs = [
            pl.BlockSpec((pl.Squeezed(), C, tile_s), x_idx),
            pl.BlockSpec((C, 1), w_idx),
        ]
        out_specs = pl.BlockSpec((pl.Squeezed(), C, tile_s), x_idx)
        dim_sem = ("parallel", "parallel")

    y3 = pl.pallas_call(
        kernel,
        out_shape=jax.ShapeDtypeStruct((N, C, S), x.dtype),
        grid_spec=pltpu.PrefetchScalarGridSpec(
            num_scalar_prefetch=0,
            grid=grid,
            in_specs=in_specs,
            out_specs=out_specs,
        ),
        compiler_params=pltpu.CompilerParams(
            dimension_semantics=dim_sem,
            vmem_limit_bytes=vmem_limit,
        ),
    )(x3, w_arr)

    return y3.reshape(N, C, H, W)


def _reference(x, weight):
    norm = jnp.sqrt(jnp.sum(x * x, axis=1, keepdims=True)) + EPS
    return weight[None, :, None, None] * (x / norm)


if __name__ == "__main__":
    # Module defaults: in_channels=512, scale=20; small synthetic config here.
    in_channels = 4
    scale = 20.0
    N, H, W = 2, 16, 16

    key = jax.random.PRNGKey(0)
    x = jax.random.normal(key, (N, in_channels, H, W), dtype=jnp.float32)
    weight = jnp.full((in_channels,), scale, dtype=jnp.float32)  # constant_ init

    out = jax.block_until_ready(l2norm_nchw(x, weight))
    ref = _reference(x, weight)
    assert out.shape == x.shape and out.dtype == x.dtype
    assert jnp.allclose(out, ref, atol=1e-5, rtol=1e-5)

    # Second config: more channels, odd spatial size (batch-blocked path).
    x2 = jax.random.normal(jax.random.PRNGKey(1), (2, 64, 7, 20), dtype=jnp.float32)
    w2 = jax.random.normal(jax.random.PRNGKey(2), (64,), dtype=jnp.float32)
    out2 = jax.block_until_ready(l2norm_nchw(x2, w2))
    assert jnp.allclose(out2, _reference(x2, w2), atol=1e-5, rtol=1e-5)

    # Third config: large image per batch element -> exercises the spatial-tiled
    # path (per-image block > 4 MiB, ragged boundary tile along S).
    x3 = jax.random.normal(jax.random.PRNGKey(3), (1, 320, 64, 64), dtype=jnp.float32)
    w3 = jax.random.normal(jax.random.PRNGKey(4), (320,), dtype=jnp.float32)
    out3 = jax.block_until_ready(l2norm_nchw(x3, w3))
    assert jnp.allclose(out3, _reference(x3, w3), atol=1e-5, rtol=1e-5)

    print("KERNEL_OK")
</pallas_src>

<mosaic_0001>
module attributes {stable_mosaic.version = 11 : i64} {
  func.func @_l2norm_kernel_batch(%arg0: i32, %arg1: memref<1x4x256xf32, #tpu.memory_space<vmem>>, %arg2: memref<1x4x1xf32, #tpu.memory_space<vmem>>, %arg3: memref<1x4x256xf32, #tpu.memory_space<vmem>>) attributes {dimension_semantics = [#tpu.dimension_semantics<parallel>], iteration_bounds = array<i64: 2>, scalar_prefetch = 0 : i64, scratch_operands = 0 : i64, tpu.core_type = #tpu.core_type<tc>, window_params = [{transform_indices = @transform_0, window_bounds = array<i64: 1, 4, 256>}, {pipeline_mode = #tpu.pipeline_mode<synchronous>, transform_indices = @transform_1, window_bounds = array<i64: 1, 4, 1>}, {transform_indices = @transform_2, window_bounds = array<i64: 1, 4, 256>}]} {
    %c0 = arith.constant 0 : index
    %c0_0 = arith.constant 0 : index
    %c0_1 = arith.constant 0 : index
    %0 = vector.load %arg1[%c0, %c0_0, %c0_1] : memref<1x4x256xf32, #tpu.memory_space<vmem>>, vector<1x4x256xf32>
    %1 = arith.mulf %0, %0 : vector<1x4x256xf32>
    %cst = arith.constant dense<0.000000e+00> : vector<1x256xf32>
    %2 = vector.multi_reduction <add>, %1, %cst [1] : vector<1x4x256xf32> to vector<1x256xf32>
    %3 = vector.shape_cast %2 : vector<1x256xf32> to vector<1x1x256xf32>
    %4 = math.sqrt %3 : vector<1x1x256xf32>
    %cst_2 = arith.constant 1.000000e-10 : f32
    %5 = vector.broadcast %cst_2 : f32 to vector<1x1x256xf32>
    %6 = arith.addf %4, %5 : vector<1x1x256xf32>
    %7 = tpu.reciprocal %6 : vector<1x1x256xf32> -> vector<1x1x256xf32>
    %c0_3 = arith.constant 0 : index
    %c0_4 = arith.constant 0 : index
    %c0_5 = arith.constant 0 : index
    %8 = vector.load %arg2[%c0_3, %c0_4, %c0_5] : memref<1x4x1xf32, #tpu.memory_space<vmem>>, vector<1x4x1xf32>
    %9 = vector.broadcast %7 : vector<1x1x256xf32> to vector<1x4x256xf32>
    %10 = arith.mulf %0, %9 : vector<1x4x256xf32>
    %11 = vector.broadcast %8 : vector<1x4x1xf32> to vector<1x4x256xf32>
    %12 = arith.mulf %10, %11 : vector<1x4x256xf32>
    %c0_6 = arith.constant 0 : index
    %c0_7 = arith.constant 0 : index
    %c0_8 = arith.constant 0 : index
    %13 = vector.load %arg3[%c0_6, %c0_7, %c0_8] : memref<1x4x256xf32, #tpu.memory_space<vmem>>, vector<1x4x256xf32>
    tpu.vector_store %arg3[%c0_6, %c0_7, %c0_8], %12 {strides = array<i32>} : memref<1x4x256xf32, #tpu.memory_space<vmem>>, vector<1x4x256xf32>,
    return
  }
  func.func @transform_0(%arg0: i32) -> (i32, i32, i32) {
    %c0_i32 = arith.constant 0 : i32
    %c0_i32_0 = arith.constant 0 : i32
    %c0_i32_1 = arith.constant 0 : i32
    return %arg0, %c0_i32, %c0_i32_0 : i32, i32, i32
  }
  func.func @transform_1(%arg0: i32) -> (i32, i32, i32) {
    %c0_i32 = arith.constant 0 : i32
    %c0_i32_0 = arith.constant 0 : i32
    %c0_i32_1 = arith.constant 0 : i32
    %c0_i32_2 = arith.constant 0 : i32
    return %c0_i32, %c0_i32_0, %c0_i32_1 : i32, i32, i32
  }
  func.func @transform_2(%arg0: i32) -> (i32, i32, i32) {
    %c0_i32 = arith.constant 0 : i32
    %c0_i32_0 = arith.constant 0 : i32
    %c0_i32_1 = arith.constant 0 : i32
    return %arg0, %c0_i32, %c0_i32_0 : i32, i32, i32
  }
}

</mosaic_0001>

<llo_original>
// kernel: tpu_custom_call.1
$region0: #{tpu_custom_call.1}
  #allocation0 [shape = 'u32[]', space=smem, size = 0x4, offset = 0x4, fixed_abs, tag = 'smem constant byte address 0x4 - core index']
  #allocation1 [shape = 'u32[144,128]{1,0:T(1,128)}', space=vmem, size = 0x12000, scoped, tag = 'internal scratch']
  %s0 = inlined_call_operand.hbm [shape: f32[2,4,256], index: 0, kind: input, shape index: {}]
  %s1 = inlined_call_operand.vmem [shape: f32[1,4,1], index: 1, kind: input, shape index: {}]
  %s2 = inlined_call_operand.hbm [shape: f32[2,4,256], index: 2, kind: output, shape index: {}]
  %s3 = sld [smem:[#allocation0]]
  $region45: #{tpu_custom_call.1} parent=0
    _
  %s5 = ssub.s32 1, %s3
  %s6 = scalar_select 0, %s5, %s3
  $region1: #{tpu_custom_call.1} parent=0
    #allocation2 [shape = 'u8[8192]{0}', space=vmem, size = 0x2000, scoped, tag = 'input window, operand 0']
    #allocation3 [shape = 's32[2]{0}', space=sflag, size = 0x8, scoped, tag = 'scoped memory for tpu_custom_call.1']
    #allocation4 [shape = 's32[2]{0}', space=sflag, size = 0x8, scoped, tag = 'scoped memory for tpu_custom_call.1']
    #allocation5 [shape = 'u8[8192]{0}', space=vmem, size = 0x2000, scoped, tag = 'output window, operand 0']
    %7 = vsyncpa [#allocation3], 0
    %s8 = scalar_lea.sflag [#allocation3], 1
    %9 = vsyncpa %s8, 0
    %10 = vsyncpa [#allocation4], 0
    %s11 = scalar_lea.sflag [#allocation4], 1
    %12 = vsyncpa %s11, 0
    loop: start=0, step=1, limit=4
    $region2: #{tpu_custom_call.1} parent=1 // loop_pre_header
      _
    $region3: #{tpu_custom_call.1} parent=1 // loop_header
      %s14 = sphi 0, %s18
      %p15 = scmp.ge.s32.totalorder %s14, 4
      %s24 = sphi 0, %s26
      %s27 = sphi 0, %s24
      %s28 = sphi 0, %s27
      %s44 = sphi 0, %s28
      %s48 = sphi 0, %s48
      %s50 = sphi 0, %s48
      %s51 = sphi 0, %s50
      %s65 = sphi 0, %s51
      %s71 = sphi 0, %s73
      %s74 = sphi 0, %s71
      %s75 = sphi 0, %s74
      %s91 = sphi 0, %s75
    $region4: #{tpu_custom_call.1} parent=1 // loop_header_branch
      %17 = sbr.rel (%p15) target = $region8
    $region5: #{tpu_custom_call.1} parent=1 // loop_body
      %s19 = ssub.s32 %s14, 1
      %s20 = ssub.s32 %s14, 2
      %s21 = sadd.s32 %s14, 1
      %s22 = ssub.s32 %s14, %s21
      %p23 = scmp.eq.s32.totalorder %s22, 0
      %s25 = sadd.s32 %s24, 1
      %s26 = scalar_select %p23, %s24, %s25
      %p29 = pneg %p23
      %p30 = scmp.eq.s32.totalorder %s14, 1
      %p31 = por %p29, %p30
      %p32 = scmp.ne.s32.totalorder %s24, %s27
      %p33 = scmp.eq.s32.totalorder %s14, 0
      %p34 = por %p32, %p33
      %p35 = scmp.ne.s32.totalorder %s24, %s27
      %p36 = scmp.eq.s32.totalorder %s19, 1
      %p37 = por %p35, %p36
      %p38 = scmp.ne.s32.totalorder %s27, %s28
      %p39 = scmp.eq.s32.totalorder %s19, 0
      %p40 = por %p38, %p39
      %p41 = scmp.ne.s32.totalorder %s27, %s28
      %p42 = scmp.eq.s32.totalorder %s20, 1
      %p43 = por %p41, %p42
      %p45 = scmp.ne.s32.totalorder %s28, %s44
      %p46 = scmp.eq.s32.totalorder %s20, 0
      %p47 = por %p45, %p46
      %s49 = sadd.s32 %s48, 1
      %p52 = scmp.eq.s32.totalorder %s14, 1
      %p53 = scmp.ne.s32.totalorder %s48, %s50
      %p54 = scmp.eq.s32.totalorder %s14, 0
      %p55 = por %p53, %p54
      %p56 = scmp.ne.s32.totalorder %s48, %s50
      %p57 = scmp.eq.s32.totalorder %s19, 1
      %p58 = por %p56, %p57
      %p59 = scmp.ne.s32.totalorder %s50, %s51
      %p60 = scmp.eq.s32.totalorder %s19, 0
      %p61 = por %p59, %p60
      %p62 = scmp.ne.s32.totalorder %s50, %s51
      %p63 = scmp.eq.s32.totalorder %s20, 1
      %p64 = por %p62, %p63
      %p66 = scmp.ne.s32.totalorder %s51, %s65
      %p67 = scmp.eq.s32.totalorder %s20, 0
      %p68 = por %p66, %p67
      %s69 = ssub.s32 %s14, %s21
      %p70 = scmp.eq.s32.totalorder %s69, 0
      %s72 = sadd.s32 %s71, 1
      %s73 = scalar_select %p70, %s71, %s72
      %p76 = pneg %p70
      %p77 = scmp.eq.s32.totalorder %s14, 1
      %p78 = por %p76, %p77
      %p79 = scmp.ne.s32.totalorder %s71, %s74
      %p80 = scmp.eq.s32.totalorder %s14, 0
      %p81 = por %p79, %p80
      %p82 = scmp.ne.s32.totalorder %s71, %s74
      %p83 = scmp.eq.s32.totalorder %s19, 1
      %p84 = por %p82, %p83
      %p85 = scmp.ne.s32.totalorder %s74, %s75
      %p86 = scmp.eq.s32.totalorder %s19, 0
      %p87 = por %p85, %p86
      %p88 = scmp.ne.s32.totalorder %s74, %s75
      %p89 = scmp.eq.s32.totalorder %s20, 1
      %p90 = por %p88, %p89
      %p92 = scmp.ne.s32.totalorder %s75, %s91
      %p93 = scmp.eq.s32.totalorder %s20, 0
      %p94 = por %p92, %p93
      %p95 = scmp.le.s32.totalorder 1, %s14
      %p96 = scmp.lt.s32.totalorder %s14, 3
      %p97 = pnand %p95, %p96
      %p98 = pneg %p97
      // Predicated region
      $region9: #{tpu_custom_call.1} parent=5 // pred_check
        _
      $region10: #{tpu_custom_call.1} parent=5 // pred_check_branch
        %100 = sbr.rel (%p97) target = $region12
      $region11: #{tpu_custom_call.1} parent=5 // pred_region
        %s101 = ssub.s32 %s14, 1
        // Predicated region
        $region13: #{tpu_custom_call.1} parent=11 // pred_check
          %p102 = pneg %p61
        $region14: #{tpu_custom_call.1} parent=11 // pred_check_branch
          %104 = sbr.rel (%p102) target = $region16
        $region15: #{tpu_custom_call.1} parent=11 // pred_region
          _
        $region16: #{tpu_custom_call.1} parent=11 // pred_fallthru
          _
      $region12: #{tpu_custom_call.1} parent=5 // pred_fallthru
        _
      %p105 = scmp.lt.s32.totalorder %s14, 2
      // Predicated region
      $region17: #{tpu_custom_call.1} parent=5 // pred_check
        %p106 = pneg %p105
      $region18: #{tpu_custom_call.1} parent=5 // pred_check_branch
        %108 = sbr.rel (%p106) target = $region20
      $region19: #{tpu_custom_call.1} parent=5 // pred_region
        // Predicated region
        $region21: #{tpu_custom_call.1} parent=19 // pred_check
          %p109 = pneg %p34
        $region22: #{tpu_custom_call.1} parent=19 // pred_check_branch
          %111 = sbr.rel (%p109) target = $region24
        $region23: #{tpu_custom_call.1} parent=19 // pred_region
          %s112 = sand.u32 %s24, 1
          %s113 = scalar_lea.sflag [#allocation3], %s112
          %s114 = sand.u32 %s24, 1
          %s115 = smul.addr %s114, 8
          %s116 = scalar_lea.vmem [#allocation2], %s115
          %s118 = ssub.s32 128, 128
          %119 = vsyncadd %s113, %s118
          %s120 = smul.addr %s14, 2
          %s121 = smul.addr %s120, 64
          %s122 = scalar_lea.hbm %s0, %s121
          %s124 = sshll.u32 %s116, 4
          %s125 = int_to_ptr.vmem [resolvable:$true] %s124
          %127 = dma.hbm_to_vmem [thread:$0]  %s122, 128, %s125, %s113
        $region24: #{tpu_custom_call.1} parent=19 // pred_fallthru
          _
      $region20: #{tpu_custom_call.1} parent=5 // pred_fallthru
        _
      %p128 = scmp.le.s32.totalorder 1, %s14
      %p129 = scmp.lt.s32.totalorder %s14, 3
      %p130 = pnand %p128, %p129
      %p131 = pneg %p130
      // Predicated region
      $region25: #{tpu_custom_call.1} parent=5 // pred_check
        _
      $region26: #{tpu_custom_call.1} parent=5 // pred_check_branch
        %133 = sbr.rel (%p130) target = $region28
      $region27: #{tpu_custom_call.1} parent=5 // pred_region
        %s134 = ssub.s32 %s14, 1
        %s135 = sand.u32 %s27, 1
        %s136 = scalar_lea.sflag [#allocation3], %s135
        %s137 = sand.u32 %s27, 1
        %s138 = smul.addr %s137, 8
        %s139 = scalar_lea.vmem [#allocation2], %s138
        // Predicated region
        $region29: #{tpu_custom_call.1} parent=27 // pred_check
          %p140 = pneg %p40
        $region30: #{tpu_custom_call.1} parent=27 // pred_check_branch
          %142 = sbr.rel (%p140) target = $region32
        $region31: #{tpu_custom_call.1} parent=27 // pred_region
          %143 = dma.done %s136, 128
        $region32: #{tpu_custom_call.1} parent=27 // pred_fallthru
          _
        %s144 = sand.u32 %s27, 1
        %s145 = scalar_lea.sflag [#allocation3], %s144
        %s146 = sand.u32 %s27, 1
        %s147 = smul.addr %s146, 8
        %s148 = scalar_lea.vmem [#allocation2], %s147
        %p149 = pneg %p40
        %p150 = pneg %p37
        %p151 = pneg %p61
        %p152 = pneg %p58
        %p153 = pneg %p87
        %p154 = pneg %p84
        %s155 = sand.u32 %s74, 1
        %s156 = scalar_lea.sflag [#allocation4], %s155
        %s157 = sand.u32 %s74, 1
        %s158 = smul.addr %s157, 8
        %s159 = scalar_lea.vmem [#allocation5], %s158
        %v160 = vld [vmem:[%s139] sm:$0xff]
        %v161 = vmul.f32 %v160, %v160
        %v163 = vcombine.high %v161, %v161
        %vm165 = vcmask 1043456
        %v166 = vsel %vm165, %v161, 0.0
        %v167 = vrot.slane %v166, 4
        %v168 = vadd.f32 %v166, %v167
        %v169 = vrot.slane %v168, 2
        %v170 = vadd.f32 %v168, %v169
        %v171 = vrot.slane %v170, 1
        %v172 = vadd.f32 %v170, %v171
        %v173 = vsel %vm165, %v163, 0.0
        %v174 = vrot.slane %v173, 4
        %v175 = vadd.f32 %v173, %v174
        %v176 = vrot.slane %v175, 2
        %v177 = vadd.f32 %v175, %v176
        %v178 = vrot.slane %v177, 1
        %v179 = vadd.f32 %v177, %v178
        %v180 = vrsqrt.pop %v172
        %v181 = vmul.f32 %v172, %v180
        %vm182 = vcmp.eq.f32.partialorder %v172, inf
        %v183 = vsel %vm182, %v172, %v181
        %vm184 = vcmp.eq.f32.partialorder %v172, 0.0
        %v185 = vand.u32 %v172, 2147483648
        %v186 = vsel %vm184, %v185, %v183
        %v187 = vrsqrt.pop %v179
        %v188 = vmul.f32 %v179, %v187
        %vm189 = vcmp.eq.f32.partialorder %v179, inf
        %v190 = vsel %vm189, %v179, %v188
        %vm191 = vcmp.eq.f32.partialorder %v179, 0.0
        %v192 = vand.u32 %v179, 2147483648
        %v193 = vsel %vm191, %v192, %v190
        %v194 = vadd.f32 %v186, 1e-10
        %v195 = vadd.f32 %v193, 1e-10
        %v196 = vrcp.pop %v194
        %v197 = vrcp.pop %v195
        %v198 = vld [vmem:[%s1] sm:$0xf]
        %v201 = vcombine.low %v196, %v197
        %v203 = vmul.f32 %v160, %v201
        %205 = vset.pattern.permute.xlu0 0
        %206 = vperm.xlu0 %205, %v198
        %v207 = vpop.permute.xlu0 %206
        %v209 = vunpack.c.l.s4 839922192
        %v210 = vunpack.c.0.s8 %v209
        %v211 = vlaneseq
        %v212 = vshrl.u32 %v211, 7
        %v213 = vsub.s32 %v210, %v212
        %v214 = vrot.slane %v207, %v213
        %v216 = vmul.f32 %v203, %v214
        %217 = vst [vmem:[%s159] sm:$0xff] %v216
        %s218 = sand.u32 %s74, 1
        %s219 = scalar_lea.sflag [#allocation4], %s218
        %s220 = sand.u32 %s74, 1
        %s221 = smul.addr %s220, 8
        %s222 = scalar_lea.vmem [#allocation5], %s221
        // Predicated region
        $region33: #{tpu_custom_call.1} parent=27 // pred_check
          %p223 = pneg %p84
        $region34: #{tpu_custom_call.1} parent=27 // pred_check_branch
          %225 = sbr.rel (%p223) target = $region36
        $region35: #{tpu_custom_call.1} parent=27 // pred_region
          %s227 = ssub.s32 128, 128
          %228 = vsyncadd %s219, %s227
          %s229 = smul.addr %s19, 2
          %s230 = smul.addr %s229, 64
          %s231 = scalar_lea.hbm %s2, %s230
          %s233 = sshll.u32 %s222, 4
          %s234 = int_to_ptr.vmem [resolvable:$true] %s233
          %236 = dma.vmem_to_hbm [thread:$0]  %s234, 128, %s231, %s219
        $region36: #{tpu_custom_call.1} parent=27 // pred_fallthru
          _
      $region28: #{tpu_custom_call.1} parent=5 // pred_fallthru
        _
      %p237 = scmp.le.s32.totalorder 2, %s14
      // Predicated region
      $region37: #{tpu_custom_call.1} parent=5 // pred_check
        %p238 = pneg %p237
      $region38: #{tpu_custom_call.1} parent=5 // pred_check_branch
        %240 = sbr.rel (%p238) target = $region40
      $region39: #{tpu_custom_call.1} parent=5 // pred_region
        %s241 = ssub.s32 %s14, 2
        // Predicated region
        $region41: #{tpu_custom_call.1} parent=39 // pred_check
          %p242 = pneg %p90
        $region42: #{tpu_custom_call.1} parent=39 // pred_check_branch
          %244 = sbr.rel (%p242) target = $region44
        $region43: #{tpu_custom_call.1} parent=39 // pred_region
          %s245 = sand.u32 %s75, 1
          %s246 = scalar_lea.sflag [#allocation4], %s245
          %s247 = sand.u32 %s75, 1
          %s248 = smul.addr %s247, 8
          %s249 = scalar_lea.vmem [#allocation5], %s248
          %250 = dma.done %s246, 128
        $region44: #{tpu_custom_call.1} parent=39 // pred_fallthru
          _
      $region40: #{tpu_custom_call.1} parent=5 // pred_fallthru
        _
    $region6: #{tpu_custom_call.1} parent=1 // loop_footer
      %s18 = sadd.s32 1, %s14
    $region7: #{tpu_custom_call.1} parent=1 // loop_footer_branch
      %13 = sbr.rel target = $region3
    $region8: #{tpu_custom_call.1} parent=1 // loop_exit
      _
    %251 = vsyncpa [#allocation3], 1
    %s252 = scalar_lea.sflag [#allocation3], 1
    %253 = vsyncpa %s252, 1
    %254 = vsyncpa [#allocation4], 1
    %s255 = scalar_lea.sflag [#allocation4], 1
    %256 = vsyncpa %s255, 1

</llo_original>
